<compile_context>
chip_gen: v6e
topology: v6e:2x2x1
jax: 0.10.0
libtpu: 0.0.40
codegen_flags: <defaults>
</compile_context>

<pallas_src>
import jax
import jax.numpy as jnp
from jax import lax
from jax.experimental import pallas as pl
from jax.experimental.pallas import tpu as pltpu


def _round_up(x, m):
    return (x + m - 1) // m * m


def twitter_classifier_kernel(idx_ref, table_ref, w_ref, b_ref, out_ref):
    # idx_ref:   (TB, L)      int32   -- token indices for this batch tile
    # table_ref: (Vpad, Dpad) float32 -- zero-padded frozen embedding table
    # w_ref:     (Dpad, Npad) float32 -- fc weight^T, pre-scaled by 1/L, zero-padded
    # b_ref:     (1, Npad)    float32 -- fc bias, zero-padded
    # out_ref:   (TB, Npad)   float32 -- lane-dense logits slab
    idx = idx_ref[...]                                   # (TB, L) int32
    tb, seq_len = idx.shape
    vpad = table_ref.shape[0]

    # Token-count matrix via vector compares (VPU); replaces the serial gather.
    vocab_ids = lax.broadcasted_iota(jnp.int32, (tb, vpad), 1)   # (TB, Vpad)
    counts = jnp.zeros((tb, vpad), jnp.float32)
    for l in range(seq_len):                              # static, small L
        tok = idx[:, l:l + 1]                             # (TB, 1) static slice
        counts = counts + (tok == vocab_ids).astype(jnp.float32)

    # Sum-pool on the MXU: (TB, Vpad) @ (Vpad, Dpad) -> (TB, Dpad)
    pooled_sum = jnp.dot(counts, table_ref[...],
                         preferred_element_type=jnp.float32)

    # Linear (mean scale already folded into w): (TB, Dpad) @ (Dpad, Npad) + b
    logits = jnp.dot(pooled_sum, w_ref[...],
                     preferred_element_type=jnp.float32) + b_ref[...]
    out_ref[...] = logits.astype(out_ref.dtype)


def twitter_classifier_forward(text, emb_table, fc_weight, fc_bias):
    """text: (B, L) int; emb_table: (V, D); fc_weight: (N, D); fc_bias: (N,)"""
    B, L = text.shape
    V, D = emb_table.shape
    N = fc_weight.shape[0]

    LANE, SUB = 128, 8
    Vpad = _round_up(V, LANE)          # K dim of pooling matmul, lane-dense counts
    Dpad = _round_up(D, LANE)
    Npad = _round_up(N, LANE)          # lane-dense output slab

    TB = min(128, _round_up(B, SUB))   # batch tile, multiple of 8
    num_tiles = pl.cdiv(B, TB)
    B_pad = num_tiles * TB

    # --- parameter / input padding (plain-JAX glue) ---
    idx_p = jnp.zeros((B_pad, L), jnp.int32).at[:B, :].set(text.astype(jnp.int32))
    table_p = jnp.zeros((Vpad, Dpad), jnp.float32).at[:V, :D].set(
        emb_table.astype(jnp.float32))
    w_scaled = (fc_weight.T.astype(jnp.float32)) * (1.0 / L)     # (D, N), mean folded in
    w_p = jnp.zeros((Dpad, Npad), jnp.float32).at[:D, :N].set(w_scaled)
    b_p = jnp.zeros((1, Npad), jnp.float32).at[0, :N].set(fc_bias.astype(jnp.float32))

    out_padded = pl.pallas_call(
        twitter_classifier_kernel,
        out_shape=jax.ShapeDtypeStruct((B_pad, Npad), jnp.float32),
        grid=(num_tiles,),
        in_specs=[
            pl.BlockSpec((TB, L), lambda i: (i, 0)),        # batch-tiled indices
            pl.BlockSpec((Vpad, Dpad), lambda i: (0, 0)),   # table, resident
            pl.BlockSpec((Dpad, Npad), lambda i: (0, 0)),   # fc weight, resident
            pl.BlockSpec((1, Npad), lambda i: (0, 0)),      # bias, resident
        ],
        out_specs=pl.BlockSpec((TB, Npad), lambda i: (i, 0)),
        compiler_params=pltpu.CompilerParams(
            dimension_semantics=("parallel",),
            vmem_limit_bytes=32 * 1024 * 1024,
        ),
    )(idx_p, table_p, w_p, b_p)

    return out_padded[:B, :N]


def reference_forward(text, emb_table, fc_weight, fc_bias):
    emb = jnp.take(emb_table, text, axis=0)        # (B, L, D)
    pooled = jnp.mean(emb, axis=1)                 # (B, D)
    return pooled @ fc_weight.T + fc_bias          # (B, N)


if __name__ == "__main__":
    key = jax.random.PRNGKey(0)
    k_emb, k_w, k_idx = jax.random.split(key, 3)

    # Small deterministic synthetic setup consistent with the module.
    num_embeddings = 64
    embedding_dim = 50
    batch = 2
    seq_len = 8

    # Frozen "pretrained" embedding matrix (EmbeddingBag.from_pretrained).
    emb_table = jax.random.normal(k_emb, (num_embeddings, embedding_dim),
                                  dtype=jnp.float32)

    # fc: Linear(embedding_dim, 2); init_weights -> uniform(-0.5, 0.5), bias zero.
    initrange = 0.5
    fc_weight = jax.random.uniform(k_w, (2, embedding_dim),
                                   minval=-initrange, maxval=initrange,
                                   dtype=jnp.float32)
    fc_bias = jnp.zeros((2,), dtype=jnp.float32)

    # text: (B, L) integer token ids, one bag per row (2-D EmbeddingBag input).
    text = jax.random.randint(k_idx, (batch, seq_len), 0, num_embeddings,
                              dtype=jnp.int32)

    out = twitter_classifier_forward(text, emb_table, fc_weight, fc_bias)
    out = jax.block_until_ready(out)

    ref = reference_forward(text, emb_table, fc_weight, fc_bias)
    assert out.shape == (batch, 2), out.shape
    assert jnp.allclose(out, ref, atol=1e-4, rtol=1e-4), (out, ref)

    print("KERNEL_OK")
</pallas_src>

<mosaic_0001>
module attributes {stable_mosaic.version = 11 : i64} {
  func.func @twitter_classifier_kernel(%arg0: i32, %arg1: memref<8x8xi32, #tpu.memory_space<vmem>>, %arg2: memref<128x128xf32, #tpu.memory_space<vmem>>, %arg3: memref<128x128xf32, #tpu.memory_space<vmem>>, %arg4: memref<1x128xf32, #tpu.memory_space<vmem>>, %arg5: memref<8x128xf32, #tpu.memory_space<vmem>>) attributes {dimension_semantics = [#tpu.dimension_semantics<parallel>], iteration_bounds = array<i64: 1>, scalar_prefetch = 0 : i64, scratch_operands = 0 : i64, tpu.core_type = #tpu.core_type<tc>, window_params = [{transform_indices = @transform_0, window_bounds = array<i64: 8, 8>}, {pipeline_mode = #tpu.pipeline_mode<synchronous>, transform_indices = @transform_1, window_bounds = array<i64: 128, 128>}, {pipeline_mode = #tpu.pipeline_mode<synchronous>, transform_indices = @transform_2, window_bounds = array<i64: 128, 128>}, {pipeline_mode = #tpu.pipeline_mode<synchronous>, transform_indices = @transform_3, window_bounds = array<i64: 1, 128>}, {transform_indices = @transform_4, window_bounds = array<i64: 8, 128>}]} {
    %c0 = arith.constant 0 : index
    %c0_0 = arith.constant 0 : index
    %0 = vector.load %arg1[%c0, %c0_0] : memref<8x8xi32, #tpu.memory_space<vmem>>, vector<8x8xi32>
    %1 = tpu.iota {dimensions = array<i32: 1>} : vector<8x128xi32>
    %cst = arith.constant 0.000000e+00 : f32
    %2 = vector.broadcast %cst : f32 to vector<8x128xf32>
    %3 = vector.extract_strided_slice %0 {offsets = [0, 0], sizes = [8, 1], strides = [1, 1]} : vector<8x8xi32> to vector<8x1xi32>
    %4 = vector.broadcast %3 : vector<8x1xi32> to vector<8x128xi32>
    %5 = arith.cmpi eq, %4, %1 : vector<8x128xi32>
    %6 = arith.extui %5 : vector<8x128xi1> to vector<8x128xi32>
    %7 = arith.sitofp %6 : vector<8x128xi32> to vector<8x128xf32>
    %8 = arith.addf %2, %7 : vector<8x128xf32>
    %9 = vector.extract_strided_slice %0 {offsets = [0, 1], sizes = [8, 1], strides = [1, 1]} : vector<8x8xi32> to vector<8x1xi32>
    %10 = vector.broadcast %9 : vector<8x1xi32> to vector<8x128xi32>
    %11 = arith.cmpi eq, %10, %1 : vector<8x128xi32>
    %12 = arith.extui %11 : vector<8x128xi1> to vector<8x128xi32>
    %13 = arith.sitofp %12 : vector<8x128xi32> to vector<8x128xf32>
    %14 = arith.addf %8, %13 : vector<8x128xf32>
    %15 = vector.extract_strided_slice %0 {offsets = [0, 2], sizes = [8, 1], strides = [1, 1]} : vector<8x8xi32> to vector<8x1xi32>
    %16 = vector.broadcast %15 : vector<8x1xi32> to vector<8x128xi32>
    %17 = arith.cmpi eq, %16, %1 : vector<8x128xi32>
    %18 = arith.extui %17 : vector<8x128xi1> to vector<8x128xi32>
    %19 = arith.sitofp %18 : vector<8x128xi32> to vector<8x128xf32>
    %20 = arith.addf %14, %19 : vector<8x128xf32>
    %21 = vector.extract_strided_slice %0 {offsets = [0, 3], sizes = [8, 1], strides = [1, 1]} : vector<8x8xi32> to vector<8x1xi32>
    %22 = vector.broadcast %21 : vector<8x1xi32> to vector<8x128xi32>
    %23 = arith.cmpi eq, %22, %1 : vector<8x128xi32>
    %24 = arith.extui %23 : vector<8x128xi1> to vector<8x128xi32>
    %25 = arith.sitofp %24 : vector<8x128xi32> to vector<8x128xf32>
    %26 = arith.addf %20, %25 : vector<8x128xf32>
    %27 = vector.extract_strided_slice %0 {offsets = [0, 4], sizes = [8, 1], strides = [1, 1]} : vector<8x8xi32> to vector<8x1xi32>
    %28 = vector.broadcast %27 : vector<8x1xi32> to vector<8x128xi32>
    %29 = arith.cmpi eq, %28, %1 : vector<8x128xi32>
    %30 = arith.extui %29 : vector<8x128xi1> to vector<8x128xi32>
    %31 = arith.sitofp %30 : vector<8x128xi32> to vector<8x128xf32>
    %32 = arith.addf %26, %31 : vector<8x128xf32>
    %33 = vector.extract_strided_slice %0 {offsets = [0, 5], sizes = [8, 1], strides = [1, 1]} : vector<8x8xi32> to vector<8x1xi32>
    %34 = vector.broadcast %33 : vector<8x1xi32> to vector<8x128xi32>
    %35 = arith.cmpi eq, %34, %1 : vector<8x128xi32>
    %36 = arith.extui %35 : vector<8x128xi1> to vector<8x128xi32>
    %37 = arith.sitofp %36 : vector<8x128xi32> to vector<8x128xf32>
    %38 = arith.addf %32, %37 : vector<8x128xf32>
    %39 = vector.extract_strided_slice %0 {offsets = [0, 6], sizes = [8, 1], strides = [1, 1]} : vector<8x8xi32> to vector<8x1xi32>
    %40 = vector.broadcast %39 : vector<8x1xi32> to vector<8x128xi32>
    %41 = arith.cmpi eq, %40, %1 : vector<8x128xi32>
    %42 = arith.extui %41 : vector<8x128xi1> to vector<8x128xi32>
    %43 = arith.sitofp %42 : vector<8x128xi32> to vector<8x128xf32>
    %44 = arith.addf %38, %43 : vector<8x128xf32>
    %45 = vector.extract_strided_slice %0 {offsets = [0, 7], sizes = [8, 1], strides = [1, 1]} : vector<8x8xi32> to vector<8x1xi32>
    %46 = vector.broadcast %45 : vector<8x1xi32> to vector<8x128xi32>
    %47 = arith.cmpi eq, %46, %1 : vector<8x128xi32>
    %48 = arith.extui %47 : vector<8x128xi1> to vector<8x128xi32>
    %49 = arith.sitofp %48 : vector<8x128xi32> to vector<8x128xf32>
    %50 = arith.addf %44, %49 : vector<8x128xf32>
    %c0_1 = arith.constant 0 : index
    %c0_2 = arith.constant 0 : index
    %51 = vector.load %arg2[%c0_1, %c0_2] : memref<128x128xf32, #tpu.memory_space<vmem>>, vector<128x128xf32>
    %cst_3 = arith.constant dense<0.000000e+00> : vector<8x128xf32>
    %52 = tpu.matmul %50, %51, %cst_3 {dimension_numbers = #tpu.dot_dimension_numbers<[1], [0], [0], [1], [0, 0, 1, 1], [], []>} : vector<8x128xf32>, vector<128x128xf32>, vector<8x128xf32> -> vector<8x128xf32>
    %c0_4 = arith.constant 0 : index
    %c0_5 = arith.constant 0 : index
    %53 = vector.load %arg3[%c0_4, %c0_5] : memref<128x128xf32, #tpu.memory_space<vmem>>, vector<128x128xf32>
    %cst_6 = arith.constant dense<0.000000e+00> : vector<8x128xf32>
    %54 = tpu.matmul %52, %53, %cst_6 {dimension_numbers = #tpu.dot_dimension_numbers<[1], [0], [0], [1], [0, 0, 1, 1], [], []>} : vector<8x128xf32>, vector<128x128xf32>, vector<8x128xf32> -> vector<8x128xf32>
    %c0_7 = arith.constant 0 : index
    %c0_8 = arith.constant 0 : index
    %55 = vector.load %arg4[%c0_7, %c0_8] : memref<1x128xf32, #tpu.memory_space<vmem>>, vector<1x128xf32>
    %56 = vector.broadcast %55 : vector<1x128xf32> to vector<8x128xf32>
    %57 = arith.addf %54, %56 : vector<8x128xf32>
    %c0_9 = arith.constant 0 : index
    %c0_10 = arith.constant 0 : index
    %58 = vector.load %arg5[%c0_9, %c0_10] : memref<8x128xf32, #tpu.memory_space<vmem>>, vector<8x128xf32>
    tpu.vector_store %arg5[%c0_9, %c0_10], %57 {strides = array<i32>} : memref<8x128xf32, #tpu.memory_space<vmem>>, vector<8x128xf32>,
    return
  }
  func.func @transform_0(%arg0: i32) -> (i32, i32) {
    %c0_i32 = arith.constant 0 : i32
    %c0_i32_0 = arith.constant 0 : i32
    return %arg0, %c0_i32 : i32, i32
  }
  func.func @transform_1(%arg0: i32) -> (i32, i32) {
    %c0_i32 = arith.constant 0 : i32
    %c0_i32_0 = arith.constant 0 : i32
    %c0_i32_1 = arith.constant 0 : i32
    return %c0_i32, %c0_i32_0 : i32, i32
  }
  func.func @transform_2(%arg0: i32) -> (i32, i32) {
    %c0_i32 = arith.constant 0 : i32
    %c0_i32_0 = arith.constant 0 : i32
    %c0_i32_1 = arith.constant 0 : i32
    return %c0_i32, %c0_i32_0 : i32, i32
  }
  func.func @transform_3(%arg0: i32) -> (i32, i32) {
    %c0_i32 = arith.constant 0 : i32
    %c0_i32_0 = arith.constant 0 : i32
    %c0_i32_1 = arith.constant 0 : i32
    return %c0_i32, %c0_i32_0 : i32, i32
  }
  func.func @transform_4(%arg0: i32) -> (i32, i32) {
    %c0_i32 = arith.constant 0 : i32
    %c0_i32_0 = arith.constant 0 : i32
    return %arg0, %c0_i32 : i32, i32
  }
}

</mosaic_0001>

<llo_original>
// kernel: tpu_custom_call.1
$region0: #{tpu_custom_call.1}
  #allocation0 [shape = 'u32[]', space=smem, size = 0x4, offset = 0x4, fixed_abs, tag = 'smem constant byte address 0x4 - core index']
  #allocation1 [shape = 'u32[144,128]{1,0:T(1,128)}', space=vmem, size = 0x12000, scoped, tag = 'internal scratch']
  %s0 = inlined_call_operand.hbm [shape: s32[8,8], index: 0, kind: input, shape index: {}]
  %s1 = inlined_call_operand.hbm [shape: f32[128,128], index: 1, kind: input, shape index: {}]
  %s2 = inlined_call_operand.hbm [shape: f32[128,128], index: 2, kind: input, shape index: {}]
  %s3 = inlined_call_operand.vmem [shape: f32[1,128], index: 3, kind: input, shape index: {}]
  %s4 = inlined_call_operand.hbm [shape: f32[8,128], index: 4, kind: output, shape index: {}]
  %s5 = sld [smem:[#allocation0]]
  $region38: #{tpu_custom_call.1} parent=0
    _
  %s7 = ssub.s32 1, %s5
  %s8 = scalar_select 0, %s7, %s5
  $region1: #{tpu_custom_call.1} parent=0
    #allocation2 [shape = 'u8[4096]{0}', space=vmem, size = 0x1000, scoped, tag = 'input window, operand 0, single buffered']
    #allocation3 [shape = 's32[1]{0}', space=sflag, size = 0x4, scoped, tag = 'scoped memory for tpu_custom_call.1']
    #allocation4 [shape = 's32[1]{0}', space=sflag, size = 0x4, scoped, tag = 'scoped memory for tpu_custom_call.1']
    #allocation5 [shape = 'u8[65536]{0}', space=vmem, size = 0x10000, scoped, tag = 'input window, operand 1, single buffered']
    #allocation6 [shape = 's32[1]{0}', space=sflag, size = 0x4, scoped, tag = 'scoped memory for tpu_custom_call.1']
    #allocation7 [shape = 'u8[65536]{0}', space=vmem, size = 0x10000, scoped, tag = 'input window, operand 2, single buffered']
    #allocation8 [shape = 'u8[4096]{0}', space=vmem, size = 0x1000, scoped, tag = 'output window, operand 0, single buffered']
    %9 = vsyncpa [#allocation3], 0
    %10 = vsyncpa [#allocation6], 0
    %11 = vsyncpa [#allocation4], 0
    // Predicated region
    $region2: #{tpu_custom_call.1} parent=1 // pred_check
      _
    $region3: #{tpu_custom_call.1} parent=1 // pred_check_branch
      %13 = sbr.rel (0) target = $region5
    $region4: #{tpu_custom_call.1} parent=1 // pred_region
      %s15 = ssub.s32 128, 128
      %16 = vsyncadd [#allocation3], %s15
      %s18 = sshll.u32 [#allocation2], 4
      %s19 = int_to_ptr.vmem [resolvable:$true] %s18
      %21 = dma.hbm_to_vmem [thread:$0]  %s0, 128, %s19, [#allocation3]
    $region5: #{tpu_custom_call.1} parent=1 // pred_fallthru
      _
    // Predicated region
    $region6: #{tpu_custom_call.1} parent=1 // pred_check
      _
    $region7: #{tpu_custom_call.1} parent=1 // pred_check_branch
      %23 = sbr.rel (0) target = $region9
    $region8: #{tpu_custom_call.1} parent=1 // pred_region
      %s25 = ssub.s32 2048, 2048
      %26 = vsyncadd [#allocation6], %s25
      %s27 = sshll.u32 [#allocation5], 4
      %s28 = int_to_ptr.vmem [resolvable:$true] %s27
      %33 = dma.hbm_to_vmem [thread:$0]  %s1, 2048, %s28, [#allocation6], 128, 128, 8
    $region9: #{tpu_custom_call.1} parent=1 // pred_fallthru
      _
    // Predicated region
    $region10: #{tpu_custom_call.1} parent=1 // pred_check
      _
    $region11: #{tpu_custom_call.1} parent=1 // pred_check_branch
      %35 = sbr.rel (0) target = $region13
    $region12: #{tpu_custom_call.1} parent=1 // pred_region
      %s37 = ssub.s32 2048, 2048
      %38 = vsyncadd [#allocation6], %s37
      %s39 = sshll.u32 [#allocation7], 4
      %s40 = int_to_ptr.vmem [resolvable:$true] %s39
      %45 = dma.hbm_to_vmem [thread:$0]  %s2, 2048, %s40, [#allocation6], 128, 128, 8
    $region13: #{tpu_custom_call.1} parent=1 // pred_fallthru
      _
    // Predicated region
    $region14: #{tpu_custom_call.1} parent=1 // pred_check
      _
    $region15: #{tpu_custom_call.1} parent=1 // pred_check_branch
      %47 = sbr.rel (0) target = $region17
    $region16: #{tpu_custom_call.1} parent=1 // pred_region
      _
    $region17: #{tpu_custom_call.1} parent=1 // pred_fallthru
      _
    // Predicated region
    $region18: #{tpu_custom_call.1} parent=1 // pred_check
      _
    $region19: #{tpu_custom_call.1} parent=1 // pred_check_branch
      %49 = sbr.rel (0) target = $region21
    $region20: #{tpu_custom_call.1} parent=1 // pred_region
      %50 = dma.done [#allocation3], 128
    $region21: #{tpu_custom_call.1} parent=1 // pred_fallthru
      _
    // Predicated region
    $region22: #{tpu_custom_call.1} parent=1 // pred_check
      _
    $region23: #{tpu_custom_call.1} parent=1 // pred_check_branch
      %52 = sbr.rel (0) target = $region25
    $region24: #{tpu_custom_call.1} parent=1 // pred_region
      %53 = dma.done [#allocation6], 2048
    $region25: #{tpu_custom_call.1} parent=1 // pred_fallthru
      _
    // Predicated region
    $region26: #{tpu_custom_call.1} parent=1 // pred_check
      _
    $region27: #{tpu_custom_call.1} parent=1 // pred_check_branch
      %55 = sbr.rel (0) target = $region29
    $region28: #{tpu_custom_call.1} parent=1 // pred_region
      %56 = dma.done [#allocation6], 2048
    $region29: #{tpu_custom_call.1} parent=1 // pred_fallthru
      _
    %v57 = vld [vmem:[#allocation2] sm:$0xff]
    %v58 = vlaneseq
    %v59 = vand.u32 %v58, 127
    %60 = vset.pattern.permute.xlu0 0
    %61 = vperm.xlu0 %60, %v57
    %v62 = vpop.permute.xlu0 %61
    %vm63 = vcmp.eq.s32.totalorder %v62, %v59
    %v64 = vsel %vm63, 1, 0
    %v65 = vcvt.s32.f32 %v64
    %v66 = vadd.f32 %v65, 0.0
    %67 = vset.pattern.permute.xlu0 1
    %68 = vperm.xlu0 %67, %v57
    %v69 = vpop.permute.xlu0 %68
    %vm70 = vcmp.eq.s32.totalorder %v69, %v59
    %v71 = vsel %vm70, 1, 0
    %v72 = vcvt.s32.f32 %v71
    %v73 = vadd.f32 %v66, %v72
    %74 = vset.pattern.permute.xlu0 2
    %75 = vperm.xlu0 %74, %v57
    %v76 = vpop.permute.xlu0 %75
    %vm77 = vcmp.eq.s32.totalorder %v76, %v59
    %v78 = vsel %vm77, 1, 0
    %v79 = vcvt.s32.f32 %v78
    %v80 = vadd.f32 %v73, %v79
    %81 = vset.pattern.permute.xlu0 3
    %82 = vperm.xlu0 %81, %v57
    %v83 = vpop.permute.xlu0 %82
    %vm84 = vcmp.eq.s32.totalorder %v83, %v59
    %v85 = vsel %vm84, 1, 0
    %v86 = vcvt.s32.f32 %v85
    %v87 = vadd.f32 %v80, %v86
    %88 = vset.pattern.permute.xlu0 4
    %89 = vperm.xlu0 %88, %v57
    %v90 = vpop.permute.xlu0 %89
    %vm91 = vcmp.eq.s32.totalorder %v90, %v59
    %v92 = vsel %vm91, 1, 0
    %v93 = vcvt.s32.f32 %v92
    %v94 = vadd.f32 %v87, %v93
    %95 = vset.pattern.permute.xlu0 5
    %96 = vperm.xlu0 %95, %v57
    %v97 = vpop.permute.xlu0 %96
    %vm98 = vcmp.eq.s32.totalorder %v97, %v59
    %v99 = vsel %vm98, 1, 0
    %v100 = vcvt.s32.f32 %v99
    %v101 = vadd.f32 %v94, %v100
    %102 = vset.pattern.permute.xlu0 6
    %103 = vperm.xlu0 %102, %v57
    %v104 = vpop.permute.xlu0 %103
    %vm105 = vcmp.eq.s32.totalorder %v104, %v59
    %v106 = vsel %vm105, 1, 0
    %v107 = vcvt.s32.f32 %v106
    %v108 = vadd.f32 %v101, %v107
    %109 = vset.pattern.permute.xlu0 7
    %110 = vperm.xlu0 %109, %v57
    %v111 = vpop.permute.xlu0 %110
    %vm112 = vcmp.eq.s32.totalorder %v111, %v59
    %v113 = vsel %vm112, 1, 0
    %v114 = vcvt.s32.f32 %v113
    %v115 = vadd.f32 %v108, %v114
    %v116 = vld [vmem:[#allocation5] sm:$0xff]
    %v117 = vld [vmem:[#allocation5 + $0x8] sm:$0xff]
    %v118 = vld [vmem:[#allocation5 + $0x10] sm:$0xff]
    %v119 = vld [vmem:[#allocation5 + $0x18] sm:$0xff]
    %v120 = vld [vmem:[#allocation5 + $0x20] sm:$0xff]
    %v121 = vld [vmem:[#allocation5 + $0x28] sm:$0xff]
    %v122 = vld [vmem:[#allocation5 + $0x30] sm:$0xff]
    %v123 = vld [vmem:[#allocation5 + $0x38] sm:$0xff]
    %v124 = vld [vmem:[#allocation5 + $0x40] sm:$0xff]
    %v125 = vld [vmem:[#allocation5 + $0x48] sm:$0xff]
    %v126 = vld [vmem:[#allocation5 + $0x50] sm:$0xff]
    %v127 = vld [vmem:[#allocation5 + $0x58] sm:$0xff]
    %v128 = vld [vmem:[#allocation5 + $0x60] sm:$0xff]
    %v129 = vld [vmem:[#allocation5 + $0x68] sm:$0xff]
    %v130 = vld [vmem:[#allocation5 + $0x70] sm:$0xff]
    %v131 = vld [vmem:[#allocation5 + $0x78] sm:$0xff]
    %132 = vmatprep.subr.mxu0 0.0
    %133 = vmatpush1.msra.mxu0 %v131
    %134 = vmatprep.subr.mxu0 0.0
    %135 = vmatpush1.msra.mxu0 %v130
    %136 = vmatprep.subr.mxu0 0.0
    %137 = vmatpush1.msra.mxu0 %v129
    %138 = vmatprep.subr.mxu0 0.0
    %139 = vmatpush1.msra.mxu0 %v128
    %140 = vmatprep.subr.mxu0 0.0
    %141 = vmatpush1.msra.mxu0 %v127
    %142 = vmatprep.subr.mxu0 0.0
    %143 = vmatpush1.msra.mxu0 %v126
    %144 = vmatprep.subr.mxu0 0.0
    %145 = vmatpush1.msra.mxu0 %v125
    %146 = vmatprep.subr.mxu0 0.0
    %147 = vmatpush1.msra.mxu0 %v124
    %148 = vmatprep.subr.mxu0 0.0
    %149 = vmatpush1.msra.mxu0 %v123
    %150 = vmatprep.subr.mxu0 0.0
    %151 = vmatpush1.msra.mxu0 %v122
    %152 = vmatprep.subr.mxu0 0.0
    %153 = vmatpush1.msra.mxu0 %v121
    %154 = vmatprep.subr.mxu0 0.0
    %155 = vmatpush1.msra.mxu0 %v120
    %156 = vmatprep.subr.mxu0 0.0
    %157 = vmatpush1.msra.mxu0 %v119
    %158 = vmatprep.subr.mxu0 0.0
    %159 = vmatpush1.msra.mxu0 %v118
    %160 = vmatprep.subr.mxu0 0.0
    %161 = vmatpush1.msra.mxu0 %v117
    %162 = vmatprep.subr.mxu0 0.0
    %163 = vmatpush1.msra.mxu0 %v116
    %164 = vmatprep.subr.mxu0 0.0
    %165 = vmatpush2.msra.mxu0 0.0
    %166 = vmatprep.subr.mxu0 0.0
    %167 = vmatpush2.msra.mxu0 0.0
    %168 = vmatprep.subr.mxu0 0.0
    %169 = vmatpush2.msra.mxu0 0.0
    %170 = vmatprep.subr.mxu0 0.0
    %171 = vmatpush2.msra.mxu0 0.0
    %172 = vmatprep.subr.mxu0 0.0
    %173 = vmatpush2.msra.mxu0 0.0
    %174 = vmatprep.subr.mxu0 0.0
    %175 = vmatpush2.msra.mxu0 0.0
    %176 = vmatprep.subr.mxu0 0.0
    %177 = vmatpush2.msra.mxu0 0.0
    %178 = vmatprep.subr.mxu0 0.0
    %179 = vmatpush2.msra.mxu0 0.0
    %180 = vmatprep.subr.mxu0 0.0
    %181 = vmatpush2.msra.mxu0 0.0
    %182 = vmatprep.subr.mxu0 0.0
    %183 = vmatpush2.msra.mxu0 0.0
    %184 = vmatprep.subr.mxu0 0.0
    %185 = vmatpush2.msra.mxu0 0.0
    %186 = vmatprep.subr.mxu0 0.0
    %187 = vmatpush2.msra.mxu0 0.0
    %188 = vmatprep.subr.mxu0 0.0
    %189 = vmatpush2.msra.mxu0 0.0
    %190 = vmatprep.subr.mxu0 0.0
    %191 = vmatpush2.msra.mxu0 0.0
    %192 = vmatprep.subr.mxu0 0.0
    %193 = vmatpush2.msra.mxu0 0.0
    %194 = vmatprep.subr.mxu0 0.0
    %195 = vmatpush2.msra.mxu0 0.0
    %196 = vmatprep.mubr.f32.mxu0 0.0
    %197 = vmatmul.mubr.f32.gmra.mxu0 %v115
    %v198 = vpop.f32.mrf.mxu0
    %v199 = vadd.f32 0.0, %v198
    %v200 = vpop.f32.mrf.mxu0
    %201 = vdwg.mxu0
    %v202 = vld [vmem:[#allocation7] sm:$0xff]
    %v203 = vld [vmem:[#allocation7 + $0x8] sm:$0xff]
    %v204 = vld [vmem:[#allocation7 + $0x10] sm:$0xff]
    %v205 = vld [vmem:[#allocation7 + $0x18] sm:$0xff]
    %v206 = vld [vmem:[#allocation7 + $0x20] sm:$0xff]
    %v207 = vld [vmem:[#allocation7 + $0x28] sm:$0xff]
    %v208 = vld [vmem:[#allocation7 + $0x30] sm:$0xff]
    %v209 = vld [vmem:[#allocation7 + $0x38] sm:$0xff]
    %v210 = vld [vmem:[#allocation7 + $0x40] sm:$0xff]
    %v211 = vld [vmem:[#allocation7 + $0x48] sm:$0xff]
    %v212 = vld [vmem:[#allocation7 + $0x50] sm:$0xff]
    %v213 = vld [vmem:[#allocation7 + $0x58] sm:$0xff]
    %v214 = vld [vmem:[#allocation7 + $0x60] sm:$0xff]
    %v215 = vld [vmem:[#allocation7 + $0x68] sm:$0xff]
    %v216 = vld [vmem:[#allocation7 + $0x70] sm:$0xff]
    %v217 = vld [vmem:[#allocation7 + $0x78] sm:$0xff]
    %v218 = vld [vmem:[%s3] sm:$0x1]
    %v220 = vlaneseq
    %v221 = vshrl.u32 %v220, 7
    %v222 = vsub.s32 0, %v221
    %v223 = vrot.slane %v218, %v222
    %225 = vmatprep.subr.mxu0 0.0
    %226 = vmatpush1.msra.mxu0 %v217
    %227 = vmatprep.subr.mxu0 0.0
    %228 = vmatpush1.msra.mxu0 %v216
    %229 = vmatprep.subr.mxu0 0.0
    %230 = vmatpush1.msra.mxu0 %v215
    %231 = vmatprep.subr.mxu0 0.0
    %232 = vmatpush1.msra.mxu0 %v214
    %233 = vmatprep.subr.mxu0 0.0
    %234 = vmatpush1.msra.mxu0 %v213
    %235 = vmatprep.subr.mxu0 0.0
    %236 = vmatpush1.msra.mxu0 %v212
    %237 = vmatprep.subr.mxu0 0.0
    %238 = vmatpush1.msra.mxu0 %v211
    %239 = vmatprep.subr.mxu0 0.0
    %240 = vmatpush1.msra.mxu0 %v210
    %241 = vmatprep.subr.mxu0 0.0
    %242 = vmatpush1.msra.mxu0 %v209
    %243 = vmatprep.subr.mxu0 0.0
    %244 = vmatpush1.msra.mxu0 %v208
    %245 = vmatprep.subr.mxu0 0.0
    %246 = vmatpush1.msra.mxu0 %v207
    %247 = vmatprep.subr.mxu0 0.0
    %248 = vmatpush1.msra.mxu0 %v206
    %249 = vmatprep.subr.mxu0 0.0
    %250 = vmatpush1.msra.mxu0 %v205
    %251 = vmatprep.subr.mxu0 0.0
    %252 = vmatpush1.msra.mxu0 %v204
    %253 = vmatprep.subr.mxu0 0.0
    %254 = vmatpush1.msra.mxu0 %v203
    %255 = vmatprep.subr.mxu0 0.0
    %256 = vmatpush1.msra.mxu0 %v202
    %257 = vmatprep.subr.mxu0 0.0
    %258 = vmatpush2.msra.mxu0 0.0
    %259 = vmatprep.subr.mxu0 0.0
    %260 = vmatpush2.msra.mxu0 0.0
    %261 = vmatprep.subr.mxu0 0.0
    %262 = vmatpush2.msra.mxu0 0.0
    %263 = vmatprep.subr.mxu0 0.0
    %264 = vmatpush2.msra.mxu0 0.0
    %265 = vmatprep.subr.mxu0 0.0
    %266 = vmatpush2.msra.mxu0 0.0
    %267 = vmatprep.subr.mxu0 0.0
    %268 = vmatpush2.msra.mxu0 0.0
    %269 = vmatprep.subr.mxu0 0.0
    %270 = vmatpush2.msra.mxu0 0.0
    %271 = vmatprep.subr.mxu0 0.0
    %272 = vmatpush2.msra.mxu0 0.0
    %273 = vmatprep.subr.mxu0 0.0
    %274 = vmatpush2.msra.mxu0 0.0
    %275 = vmatprep.subr.mxu0 0.0
    %276 = vmatpush2.msra.mxu0 0.0
    %277 = vmatprep.subr.mxu0 0.0
    %278 = vmatpush2.msra.mxu0 0.0
    %279 = vmatprep.subr.mxu0 0.0
    %280 = vmatpush2.msra.mxu0 0.0
    %281 = vmatprep.subr.mxu0 0.0
    %282 = vmatpush2.msra.mxu0 0.0
    %283 = vmatprep.subr.mxu0 0.0
    %284 = vmatpush2.msra.mxu0 0.0
    %285 = vmatprep.subr.mxu0 0.0
    %286 = vmatpush2.msra.mxu0 0.0
    %287 = vmatprep.subr.mxu0 0.0
    %288 = vmatpush2.msra.mxu0 0.0
    %289 = vmatprep.mubr.f32.mxu0 0.0
    %290 = vmatmul.mubr.f32.gmra.mxu0 %v199
    %v291 = vpop.f32.mrf.mxu0
    %v292 = vadd.f32 %v223, %v291
    %v293 = vpop.f32.mrf.mxu0
    %294 = vdwg.mxu0
    %295 = vst [vmem:[#allocation8] sm:$0xff] %v292
    // Predicated region
    $region30: #{tpu_custom_call.1} parent=1 // pred_check
      _
    $region31: #{tpu_custom_call.1} parent=1 // pred_check_branch
      %297 = sbr.rel (0) target = $region33
    $region32: #{tpu_custom_call.1} parent=1 // pred_region
      %s299 = ssub.s32 128, 128
      %300 = vsyncadd [#allocation4], %s299
      %s302 = sshll.u32 [#allocation8], 4
      %s303 = int_to_ptr.vmem [resolvable:$true] %s302
      %305 = dma.vmem_to_hbm [thread:$0]  %s303, 128, %s4, [#allocation4]
    $region33: #{tpu_custom_call.1} parent=1 // pred_fallthru
      _
    // Predicated region
    $region34: #{tpu_custom_call.1} parent=1 // pred_check
      _
    $region35: #{tpu_custom_call.1} parent=1 // pred_check_branch
      %307 = sbr.rel (0) target = $region37
    $region36: #{tpu_custom_call.1} parent=1 // pred_region
      %308 = dma.done [#allocation4], 128
    $region37: #{tpu_custom_call.1} parent=1 // pred_fallthru
      _
    %309 = vsyncpa [#allocation3], 1
    %310 = vsyncpa [#allocation6], 1
    %311 = vsyncpa [#allocation4], 1

</llo_original>
